<compile_context>
chip_gen: v7x
topology: tpu7x:2x2x1
jax: 0.10.0
libtpu: 0.0.40
codegen_flags: <defaults>
</compile_context>

<pallas_src>
import jax
import jax.numpy as jnp
from jax.experimental import pallas as pl
from jax.experimental.pallas import tpu as pltpu


def _round_up(n, m):
    return ((n + m - 1) // m) * m


def bl_layer_kernel(x_ref, w_ref, b_ref, o_ref):
    # x_ref: (TB, K) f32 lane-dense input tile          (K = d1*t1)
    # w_ref: (K, N)  bf16 fused grid-invariant weight   (N = d2*t2)
    # b_ref: (1, N)  f32 flattened bias
    # o_ref: (TB, N) f32 lane-dense output tile
    x = x_ref[...].astype(jnp.bfloat16)  # bf16 operands -> single-pass MXU, f32 accumulate
    y = jnp.dot(x, w_ref[...], preferred_element_type=jnp.float32)
    y = y + b_ref[...]                   # bias + relu in f32
    o_ref[...] = jnp.maximum(y, 0.0).astype(o_ref.dtype)


def bl_layer(x, w1, w2, b, *, tb=4096):
    """relu(W1 @ x @ W2 + B) for x of shape (batch, d1, t1)."""
    batch, d1, t1 = x.shape
    d2, _ = w1.shape
    _, t2 = w2.shape
    K = d1 * t1
    N = d2 * t2

    # Fuse W1 (d2,d1) and W2 (t1,t2) into one (K, N) weight:
    #   out[n, a, d] = sum_{b,c} W1[a,b] * x[n,b,c] * W2[c,d]
    #   => W_eff[b*t1 + c, a*t2 + d] = W1[a,b] * W2[c,d]
    w_eff = jnp.einsum("ab,cd->bcad", w1, w2).reshape(K, N).astype(jnp.bfloat16)
    b_flat = b.reshape(1, N).astype(jnp.float32)

    # Lane-dense input: flatten (d1, t1) -> K on the lane axis.
    x_flat = x.reshape(batch, K)

    # Batch tile: multiple of 8 sublanes, capped at `tb`, and additionally capped
    # at ~batch/2 so the grid has >= 2 steps whenever possible (megacore on v7x).
    half = _round_up(pl.cdiv(batch, 2), 8)
    tb_eff = max(8, min(tb, half))
    grid = (pl.cdiv(batch, tb_eff),)  # partial last block handled by Pallas (masked stores)

    cost = pl.CostEstimate(
        flops=2 * batch * K * N,
        transcendentals=0,
        bytes_accessed=batch * (K + N) * 4 + K * N * 2 + N * 4,
    )

    out_flat = pl.pallas_call(
        bl_layer_kernel,
        out_shape=jax.ShapeDtypeStruct((batch, N), x.dtype),
        grid_spec=pltpu.PrefetchScalarGridSpec(
            num_scalar_prefetch=0,
            grid=grid,
            in_specs=[
                pl.BlockSpec((tb_eff, K), lambda i: (i, 0)),   # batch tile of x
                pl.BlockSpec((K, N), lambda i: (0, 0)),        # fused weight (grid-invariant)
                pl.BlockSpec((1, N), lambda i: (0, 0)),        # flattened bias (grid-invariant)
            ],
            out_specs=pl.BlockSpec((tb_eff, N), lambda i: (i, 0)),
        ),
        compiler_params=pltpu.CompilerParams(
            dimension_semantics=("parallel",),        # megacore shards the batch axis
            vmem_limit_bytes=32 * 1024 * 1024,        # ~17 MiB used at tb=4096; safe on 64 MiB v7x
        ),
        cost_estimate=cost,
    )(x_flat, w_eff, b_flat)

    # Restore (batch, d2, t2) layout (no padding was added, nothing to slice).
    return out_flat.reshape(batch, d2, t2)


def kaiming_uniform_relu(key, shape):
    # Matches nn.init.kaiming_uniform_(w, nonlinearity='relu') for a 2D tensor:
    # gain = sqrt(2), fan_in = shape[1], bound = gain * sqrt(3 / fan_in)
    fan_in = shape[1]
    bound = jnp.sqrt(6.0 / fan_in)
    return jax.random.uniform(key, shape, jnp.float32, -bound, bound)


if __name__ == "__main__":
    # Small TABL-like shapes: (d2, d1, t1, t2)
    d2, d1, t1, t2 = 32, 16, 10, 8

    key = jax.random.PRNGKey(0)
    k_x, k_w1, k_w2, k_x2 = jax.random.split(key, 4)

    W1 = kaiming_uniform_relu(k_w1, (d2, d1))
    W2 = kaiming_uniform_relu(k_w2, (t1, t2))
    B = jnp.zeros((d2, t2), jnp.float32)  # nn.init.constant_(B, 0)

    # Jit the wrapper so the W_eff einsum / casts are folded out of the hot path.
    bl = jax.jit(bl_layer, static_argnames=("tb",))

    # Tolerance reflects the bf16 matmul operands (f32 accumulation).
    ATOL = RTOL = 5e-2

    # Case 1: tiny batch (single partial block, grid=(1,)).
    batch = 2
    x = jax.random.normal(k_x, (batch, d1, t1), jnp.float32)
    out = jax.block_until_ready(bl(x, W1, W2, B))
    ref = jnp.maximum(jnp.einsum("ab,nbc,cd->nad", W1, x, W2) + B, 0.0)
    assert out.shape == (batch, d2, t2)
    assert jnp.allclose(out, ref, atol=ATOL, rtol=RTOL), float(jnp.max(jnp.abs(out - ref)))

    # Case 2: batch not a multiple of the tile (multi-step grid + partial last block).
    batch2 = 260
    x2 = jax.random.normal(k_x2, (batch2, d1, t1), jnp.float32)
    out2 = jax.block_until_ready(bl(x2, W1, W2, B, tb=128))
    ref2 = jnp.maximum(jnp.einsum("ab,nbc,cd->nad", W1, x2, W2) + B, 0.0)
    assert out2.shape == (batch2, d2, t2)
    assert jnp.allclose(out2, ref2, atol=ATOL, rtol=RTOL), float(jnp.max(jnp.abs(out2 - ref2)))

    print("KERNEL_OK")
</pallas_src>

<mosaic_0001>
module attributes {stable_mosaic.version = 11 : i64} {
  func.func @bl_layer_kernel(%arg0: i32, %arg1: memref<8x160xf32, #tpu.memory_space<vmem>>, %arg2: memref<160x256xbf16, #tpu.memory_space<vmem>>, %arg3: memref<1x256xf32, #tpu.memory_space<vmem>>, %arg4: memref<8x256xf32, #tpu.memory_space<vmem>>) attributes {dimension_semantics = [#tpu.dimension_semantics<parallel>], iteration_bounds = array<i64: 1>, scalar_prefetch = 0 : i64, scratch_operands = 0 : i64, tpu.core_type = #tpu.core_type<tc>, window_params = [{transform_indices = @transform_0, window_bounds = array<i64: 8, 160>}, {pipeline_mode = #tpu.pipeline_mode<synchronous>, transform_indices = @transform_1, window_bounds = array<i64: 160, 256>}, {pipeline_mode = #tpu.pipeline_mode<synchronous>, transform_indices = @transform_2, window_bounds = array<i64: 1, 256>}, {transform_indices = @transform_3, window_bounds = array<i64: 8, 256>}]} {
    %c0 = arith.constant 0 : index
    %c0_0 = arith.constant 0 : index
    %0 = vector.load %arg1[%c0, %c0_0] : memref<8x160xf32, #tpu.memory_space<vmem>>, vector<8x160xf32>
    %1 = arith.truncf %0 : vector<8x160xf32> to vector<8x160xbf16>
    %c0_1 = arith.constant 0 : index
    %c0_2 = arith.constant 0 : index
    %2 = vector.load %arg2[%c0_1, %c0_2] : memref<160x256xbf16, #tpu.memory_space<vmem>>, vector<160x256xbf16>
    %cst = arith.constant dense<0.000000e+00> : vector<8x256xf32>
    %3 = tpu.matmul %1, %2, %cst {dimension_numbers = #tpu.dot_dimension_numbers<[1], [0], [0], [1], [0, 0, 1, 1], [], []>} : vector<8x160xbf16>, vector<160x256xbf16>, vector<8x256xf32> -> vector<8x256xf32>
    %c0_3 = arith.constant 0 : index
    %c0_4 = arith.constant 0 : index
    %4 = vector.load %arg3[%c0_3, %c0_4] : memref<1x256xf32, #tpu.memory_space<vmem>>, vector<1x256xf32>
    %5 = vector.broadcast %4 : vector<1x256xf32> to vector<8x256xf32>
    %6 = arith.addf %3, %5 : vector<8x256xf32>
    %cst_5 = arith.constant 0.000000e+00 : f32
    %7 = vector.broadcast %cst_5 : f32 to vector<8x256xf32>
    %8 = arith.maximumf %6, %7 : vector<8x256xf32>
    %c0_6 = arith.constant 0 : index
    %c0_7 = arith.constant 0 : index
    %9 = vector.load %arg4[%c0_6, %c0_7] : memref<8x256xf32, #tpu.memory_space<vmem>>, vector<8x256xf32>
    tpu.vector_store %arg4[%c0_6, %c0_7], %8 {strides = array<i32>} : memref<8x256xf32, #tpu.memory_space<vmem>>, vector<8x256xf32>,
    return
  }
  func.func @transform_0(%arg0: i32) -> (i32, i32) {
    %c0_i32 = arith.constant 0 : i32
    %c0_i32_0 = arith.constant 0 : i32
    return %arg0, %c0_i32 : i32, i32
  }
  func.func @transform_1(%arg0: i32) -> (i32, i32) {
    %c0_i32 = arith.constant 0 : i32
    %c0_i32_0 = arith.constant 0 : i32
    %c0_i32_1 = arith.constant 0 : i32
    return %c0_i32, %c0_i32_0 : i32, i32
  }
  func.func @transform_2(%arg0: i32) -> (i32, i32) {
    %c0_i32 = arith.constant 0 : i32
    %c0_i32_0 = arith.constant 0 : i32
    %c0_i32_1 = arith.constant 0 : i32
    return %c0_i32, %c0_i32_0 : i32, i32
  }
  func.func @transform_3(%arg0: i32) -> (i32, i32) {
    %c0_i32 = arith.constant 0 : i32
    %c0_i32_0 = arith.constant 0 : i32
    return %arg0, %c0_i32 : i32, i32
  }
}

</mosaic_0001>

<llo_original>
// kernel: bl_layer.1
$region0: #{bl_layer.1}
  #allocation0 [shape = 'u32[]', space=smem, size = 0x4, offset = 0x4, fixed_abs, tag = 'smem constant byte address 0x4 - core index']
  #allocation1 [shape = 'u32[144,128]{1,0:T(1,128)}', space=vmem, size = 0x12000, scoped, tag = 'internal scratch']
  %s0 = inlined_call_operand.vmem [shape: f32[2,160], index: 0, kind: input, shape index: {}]
  %s1 = inlined_call_operand.vmem [shape: bf16[160,256], index: 1, kind: input, shape index: {}]
  %s2 = inlined_call_operand.vmem [shape: f32[1,256], index: 2, kind: input, shape index: {}]
  %s3 = inlined_call_operand.vmem [shape: f32[2,256], index: 3, kind: output, shape index: {}]
  %s4 = sld [smem:[#allocation0]]
  $region52: #{bl_layer.1} parent=0
    _
  %s6 = ssub.s32 1, %s4
  %s7 = scalar_select 0, %s6, %s4
  $region1: #{bl_layer.1} parent=0
    #allocation2 [shape = 'u8[8192]{0}', space=vmem, size = 0x2000, scoped, tag = 'output window, operand 0, single buffered']
    // Predicated region
    $region2: #{bl_layer.1} parent=1 // pred_check
      _
    $region3: #{bl_layer.1} parent=1 // pred_check_branch
      %9 = sbr.rel (0) target = $region5
    $region4: #{bl_layer.1} parent=1 // pred_region
      _
    $region5: #{bl_layer.1} parent=1 // pred_fallthru
      _
    // Predicated region
    $region6: #{bl_layer.1} parent=1 // pred_check
      _
    $region7: #{bl_layer.1} parent=1 // pred_check_branch
      %11 = sbr.rel (0) target = $region9
    $region8: #{bl_layer.1} parent=1 // pred_region
      _
    $region9: #{bl_layer.1} parent=1 // pred_fallthru
      _
    // Predicated region
    $region10: #{bl_layer.1} parent=1 // pred_check
      _
    $region11: #{bl_layer.1} parent=1 // pred_check_branch
      %13 = sbr.rel (0) target = $region13
    $region12: #{bl_layer.1} parent=1 // pred_region
      _
    $region13: #{bl_layer.1} parent=1 // pred_fallthru
      _
    %v15 = vld [vmem:[%s0] sm:$0xf]
    %v16 = vld [vmem:[%s0 + $0x4] sm:$0xf]
    %v17 = vld [vmem:[%s0 + $0x8] sm:$0xf]
    %v18 = vld [vmem:[%s0 + $0xc] sm:$0xf]
    %v23 = vcombine.low %v15, %v16
    %v24 = vcombine.low %v17, %v18
    %v26 = vunpack.c.l.s4 1983009808
    %v27 = vunpack.c.0.s8 %v26
    %v28 = vlaneseq
    %v29 = vshrl.u32 %v28, 7
    %v30 = vsub.s32 %v27, %v29
    %v31 = vrot.slane %v23, %v30
    %v33 = vunpack.c.l.s4 1983009808
    %v34 = vunpack.c.0.s8 %v33
    %v35 = vlaneseq
    %v36 = vshrl.u32 %v35, 7
    %v37 = vsub.s32 %v34, %v36
    %v38 = vrot.slane %v24, %v37
    %v39 = vcombine.low %v31, %v38
    %v40 = vcombine.high %v31, %v38
    %v43 = vpack.c.bf16 %v39, %v39
    %v44 = vpack.c.bf16 %v40, %v40
    %v45 = vld [vmem:[%s1] sm:$0xff]
    %v46 = vld [vmem:[%s1 + $0x8] sm:$0xff]
    %v47 = vld [vmem:[%s1 + $0x10] sm:$0xff]
    %v48 = vld [vmem:[%s1 + $0x18] sm:$0xff]
    %v49 = vld [vmem:[%s1 + $0x20] sm:$0xff]
    %v50 = vld [vmem:[%s1 + $0x28] sm:$0xff]
    %v51 = vld [vmem:[%s1 + $0x30] sm:$0xff]
    %v52 = vld [vmem:[%s1 + $0x38] sm:$0xff]
    %v53 = vld [vmem:[%s1 + $0x40] sm:$0xff]
    %v54 = vld [vmem:[%s1 + $0x48] sm:$0xff]
    %v55 = vld [vmem:[%s1 + $0x50] sm:$0xff]
    %v56 = vld [vmem:[%s1 + $0x58] sm:$0xff]
    %v57 = vld [vmem:[%s1 + $0x60] sm:$0xff]
    %v58 = vld [vmem:[%s1 + $0x68] sm:$0xff]
    %v59 = vld [vmem:[%s1 + $0x70] sm:$0xff]
    %v60 = vld [vmem:[%s1 + $0x78] sm:$0xff]
    %v61 = vld [vmem:[%s1 + $0x80] sm:$0xff]
    %v62 = vld [vmem:[%s1 + $0x88] sm:$0xff]
    %v63 = vld [vmem:[%s1 + $0x90] sm:$0xff]
    %v64 = vld [vmem:[%s1 + $0x98] sm:$0xff]
    %v65 = vld [vmem:[%s2] sm:$0x3]
    %v67 = vlaneseq
    %v68 = vshrl.u32 %v67, 7
    %v69 = vsub.s32 0, %v68
    %v70 = vrot.slane %v65, %v69
    %v71 = vlaneseq
    %v72 = vshrl.u32 %v71, 7
    %v73 = vsub.s32 1, %v72
    %v74 = vrot.slane %v65, %v73
    %v97 = vunpack.c.l.b16 %v45
    %v98 = vunpack.c.h.b16 %v45
    %v99 = vunpack.c.l.b16 %v46
    %v100 = vunpack.c.h.b16 %v46
    %v101 = vunpack.c.l.b16 %v47
    %v102 = vunpack.c.h.b16 %v47
    %v103 = vunpack.c.l.b16 %v48
    %v104 = vunpack.c.h.b16 %v48
    %v105 = vunpack.c.l.b16 %v49
    %v106 = vunpack.c.h.b16 %v49
    %v107 = vunpack.c.l.b16 %v50
    %v108 = vunpack.c.h.b16 %v50
    %v109 = vunpack.c.l.b16 %v51
    %v110 = vunpack.c.h.b16 %v51
    %v111 = vunpack.c.l.b16 %v52
    %v112 = vunpack.c.h.b16 %v52
    %v113 = vunpack.c.l.b16 %v53
    %v114 = vunpack.c.h.b16 %v53
    %v115 = vunpack.c.l.b16 %v54
    %v116 = vunpack.c.h.b16 %v54
    %v117 = vunpack.c.l.b16 %v55
    %v118 = vunpack.c.h.b16 %v55
    %v119 = vunpack.c.l.b16 %v56
    %v120 = vunpack.c.h.b16 %v56
    %v121 = vunpack.c.l.b16 %v57
    %v122 = vunpack.c.h.b16 %v57
    %v123 = vunpack.c.l.b16 %v58
    %v124 = vunpack.c.h.b16 %v58
    %v125 = vunpack.c.l.b16 %v59
    %v126 = vunpack.c.h.b16 %v59
    %v127 = vunpack.c.l.b16 %v60
    %v128 = vunpack.c.h.b16 %v60
    %v129 = vunpack.c.l.b16 %v61
    %v130 = vunpack.c.h.b16 %v61
    %v131 = vunpack.c.l.b16 %v62
    %v132 = vunpack.c.h.b16 %v62
    %v133 = vunpack.c.l.b16 %v63
    %v134 = vunpack.c.h.b16 %v63
    %v135 = vunpack.c.l.b16 %v64
    %v136 = vunpack.c.h.b16 %v64
    %v137 = vpack.c.b16 %v99, %v97
    %v138 = vpack.c.b16 %v100, %v98
    %v139 = vpack.c.b16 %v103, %v101
    %v140 = vpack.c.b16 %v104, %v102
    %v141 = vpack.c.b16 %v107, %v105
    %v142 = vpack.c.b16 %v108, %v106
    %v143 = vpack.c.b16 %v111, %v109
    %v144 = vpack.c.b16 %v112, %v110
    %v145 = vpack.c.b16 %v115, %v113
    %v146 = vpack.c.b16 %v116, %v114
    %v147 = vpack.c.b16 %v119, %v117
    %v148 = vpack.c.b16 %v120, %v118
    %v149 = vpack.c.b16 %v123, %v121
    %v150 = vpack.c.b16 %v124, %v122
    %v151 = vpack.c.b16 %v127, %v125
    %v152 = vpack.c.b16 %v128, %v126
    %v153 = vpack.c.b16 %v131, %v129
    %v154 = vpack.c.b16 %v132, %v130
    %v155 = vpack.c.b16 %v135, %v133
    %v156 = vpack.c.b16 %v136, %v134
    %vm177 = vcmask 261120
    %v179 = vsel %vm177, %v44, 0
    %181 = vmatprep.subr.bf16.mxu0 %v138
    %182 = vmatpush1.bf16.msra.mxu0 %v137
    %183 = vmatprep.subr.bf16.mxu0 %v140
    %184 = vmatpush1.bf16.msra.mxu0 %v139
    %185 = vmatprep.subr.bf16.mxu0 %v142
    %186 = vmatpush1.bf16.msra.mxu0 %v141
    %187 = vmatprep.subr.bf16.mxu0 %v144
    %188 = vmatpush1.bf16.msra.mxu0 %v143
    %189 = vmatprep.subr.bf16.mxu0 %v146
    %190 = vmatpush1.bf16.msra.mxu0 %v145
    %191 = vmatprep.subr.bf16.mxu0 %v148
    %192 = vmatpush1.bf16.msra.mxu0 %v147
    %193 = vmatprep.subr.bf16.mxu0 %v150
    %194 = vmatpush1.bf16.msra.mxu0 %v149
    %195 = vmatprep.subr.bf16.mxu0 %v152
    %196 = vmatpush1.bf16.msra.mxu0 %v151
    %197 = vmatprep.subr.bf16.mxu0 %v154
    %198 = vmatpush1.bf16.msra.mxu0 %v153
    %199 = vmatprep.subr.bf16.mxu0 %v156
    %200 = vmatpush1.bf16.msra.mxu0 %v155
    %201 = vmatprep.subr.bf16.mxu0 0
    %202 = vmatpush1.bf16.msra.mxu0 0
    %203 = vmatprep.subr.bf16.mxu0 0
    %204 = vmatpush1.bf16.msra.mxu0 0
    %205 = vmatprep.subr.bf16.mxu0 0
    %206 = vmatpush1.bf16.msra.mxu0 0
    %207 = vmatprep.subr.bf16.mxu0 0
    %208 = vmatpush1.bf16.msra.mxu0 0
    %209 = vmatprep.subr.bf16.mxu0 0
    %210 = vmatpush1.bf16.msra.mxu0 0
    %211 = vmatprep.subr.bf16.mxu0 0
    %212 = vmatpush1.bf16.msra.mxu0 0
    %213 = vmatprep.mubr.bf16.mxu0 %v179
    %214 = vmatmul.mubr.bf16.gmra.mrb[0].mxu0 %v43
    %v215 = vpop.f32.mrb[0].mxu0
    %v216 = vadd.f32 %v70, %v215
    %v217 = vpop.f32.mrb[0].mxu0
    %v218 = vadd.f32 %v74, %v217
    %v219 = vpop.f32.mrb[0].mxu0
    %v220 = vpop.f32.mrb[0].mxu0
    %221 = vdwg.mxu0
    %v222 = vmax.f32 %v216, 0.0
    %v223 = vmax.f32 %v218, 0.0
    %v226 = vcombine.low %v222, %v223
    %v227 = vcombine.high %v222, %v223
    %v229 = vunpack.c.l.s4 1983009808
    %v230 = vunpack.c.0.s8 %v229
    %v231 = vlaneseq
    %v232 = vshrl.u32 %v231, 7
    %v233 = vsub.s32 %v230, %v232
    %v234 = vrot.slane %v226, %v233
    %v236 = vunpack.c.l.s4 1983009808
    %v237 = vunpack.c.0.s8 %v236
    %v238 = vlaneseq
    %v239 = vshrl.u32 %v238, 7
    %v240 = vsub.s32 %v237, %v239
    %v241 = vrot.slane %v227, %v240
    %v242 = vcombine.high %v234, %v234
    %v243 = vcombine.high %v241, %v241
    %248 = vst [vmem:[#allocation2] sm:$0xf] %v234
    %249 = vst [vmem:[#allocation2 + $0x4] sm:$0xf] %v242
    %250 = vst [vmem:[#allocation2 + $0x8] sm:$0xf] %v241
    %251 = vst [vmem:[#allocation2 + $0xc] sm:$0xf] %v243
    // Predicated region
    $region14: #{bl_layer.1} parent=1 // pred_check
      _
    $region15: #{bl_layer.1} parent=1 // pred_check_branch
      %253 = sbr.rel (0) target = $region17
    $region16: #{bl_layer.1} parent=1 // pred_region
      // Predicated region
      $region18: #{bl_layer.1} parent=16 // pred_check
        _
      $region19: #{bl_layer.1} parent=16 // pred_check_branch
        %255 = sbr.rel (0) target = $region21
      $region20: #{bl_layer.1} parent=16 // pred_region
        // Predicated region
        $region22: #{bl_layer.1} parent=20 // pred_check
          _
        $region23: #{bl_layer.1} parent=20 // pred_check_branch
          %257 = sbr.rel target = $region25
        $region24: #{bl_layer.1} parent=20 // pred_region
          // Predicated region
          $region37: #{bl_layer.1} parent=24 // pred_check
            _
          $region38: #{bl_layer.1} parent=24 // pred_check_branch
            %272 = sbr.rel (0) target = $region40
          $region39: #{bl_layer.1} parent=24 // pred_region
            loop: start=0, step=1, limit=1
            $region41: #{bl_layer.1} parent=39 // loop_pre_header
              _
            $region42: #{bl_layer.1} parent=39 // loop_header
              %s275 = sphi 0, %s279
              %p276 = scmp.ge.s32.totalorder %s275, 1
              %s280 = sphi [#allocation2], [#allocation2]
              %s281 = sphi %s3, %s3
            $region43: #{bl_layer.1} parent=39 // loop_header_branch
              %278 = sbr.rel (%p276) target = $region47
            $region44: #{bl_layer.1} parent=39 // loop_body
              %v282 = vld [vmem:[%s280] sm:$0xf]
              %283 = vst [vmem:[%s281] sm:$0xf] %v282
            $region45: #{bl_layer.1} parent=39 // loop_footer
              %s279 = sadd.s32 1, %s275
            $region46: #{bl_layer.1} parent=39 // loop_footer_branch
              %274 = sbr.rel target = $region42
            $region47: #{bl_layer.1} parent=39 // loop_exit
              _
          $region40: #{bl_layer.1} parent=24 // pred_fallthru
            _
        $region25: #{bl_layer.1} parent=20 // pred_fallthru
          _
        // Predicated region
        $region26: #{bl_layer.1} parent=20 // pred_check
          _
        $region27: #{bl_layer.1} parent=20 // pred_check_branch
          %259 = sbr.rel (0) target = $region29
        $region28: #{bl_layer.1} parent=20 // pred_region
          loop: start=0, step=1, limit=1
          $region30: #{bl_layer.1} parent=28 // loop_pre_header
            _
          $region31: #{bl_layer.1} parent=28 // loop_header
            %s262 = sphi 0, %s266
            %p263 = scmp.ge.s32.totalorder %s262, 1
            %s267 = sphi [#allocation2], [#allocation2]
            %s268 = sphi %s3, %s3
          $region32: #{bl_layer.1} parent=28 // loop_header_branch
            %265 = sbr.rel (%p263) target = $region36
          $region33: #{bl_layer.1} parent=28 // loop_body
            %v269 = vld [vmem:[%s267] sm:$0xf]
            %270 = vst [vmem:[%s268] sm:$0xf] %v269
          $region34: #{bl_layer.1} parent=28 // loop_footer
            %s266 = sadd.s32 1, %s262
          $region35: #{bl_layer.1} parent=28 // loop_footer_branch
            %261 = sbr.rel target = $region31
          $region36: #{bl_layer.1} parent=28 // loop_exit
            _
        $region29: #{bl_layer.1} parent=20 // pred_fallthru
          _
      $region21: #{bl_layer.1} parent=16 // pred_fallthru
        _
      %284 = vnop
    $region17: #{bl_layer.1} parent=1 // pred_fallthru
      _
    // Predicated region
    $region48: #{bl_layer.1} parent=1 // pred_check
      _
    $region49: #{bl_layer.1} parent=1 // pred_check_branch
      %286 = sbr.rel (0) target = $region51
    $region50: #{bl_layer.1} parent=1 // pred_region
      _
    $region51: #{bl_layer.1} parent=1 // pred_fallthru
      _

</llo_original>
